<compile_context>
chip_gen: v5e
topology: v5e:2x2
jax: 0.10.0
libtpu: 0.0.40
codegen_flags: <defaults>
</compile_context>

<pallas_src>
import math

import jax
import jax.numpy as jnp
from jax.experimental import pallas as pl
from jax.experimental.pallas import tpu as pltpu


def _dma_identity_kernel(x_hbm_ref, o_hbm_ref, sem):
    # Single whole-array HBM -> HBM DMA of the original OIHW tensor.
    cp = pltpu.make_async_copy(x_hbm_ref, o_hbm_ref, sem)
    cp.start()
    cp.wait()


def conv_kernel_forward(kern: jax.Array) -> jax.Array:
    """Pallas equivalent of convKernel.forward(): return the parameter.

    NOTE: if no explicit materialization boundary is required, prefer
    `return kern` (zero cost).  This kernel exists only as an optimized
    explicit copy: one DMA, no grid, no padding, no VMEM staging.
    """
    bytes_accessed = 2 * kern.size * jnp.dtype(kern.dtype).itemsize
    return pl.pallas_call(
        _dma_identity_kernel,
        out_shape=jax.ShapeDtypeStruct(kern.shape, kern.dtype),
        in_specs=[pl.BlockSpec(memory_space=pl.ANY)],
        out_specs=pl.BlockSpec(memory_space=pl.ANY),
        scratch_shapes=[pltpu.SemaphoreType.DMA(())],
        cost_estimate=pl.CostEstimate(
            flops=0, transcendentals=0, bytes_accessed=bytes_accessed),
    )(kern)


def init_conv_kernel_param(key, out_channels, prev_channels, sx, sy,
                           dtype=jnp.float32):
    """Deterministic re-implementation of the PyTorch __init__:
    kern ~ Uniform(-stdv, stdv), stdv = 1/sqrt(prev_channels*sx*sy)."""
    n = prev_channels * sx * sy
    stdv = 1.0 / math.sqrt(n)
    return jax.random.uniform(
        key,
        (out_channels, prev_channels, sx, sy),
        dtype=dtype,
        minval=-stdv,
        maxval=stdv,
    )


if __name__ == "__main__":
    key = jax.random.PRNGKey(0)

    # Small conv-weight shape: out_channels=4, prev_channels=4, 3x3 spatial.
    out_channels, prev_channels, sx, sy = 4, 4, 3, 3
    kern = init_conv_kernel_param(key, out_channels, prev_channels, sx, sy)

    out = jax.block_until_ready(conv_kernel_forward(kern))
    assert out.shape == (out_channels, prev_channels, sx, sy)
    assert out.dtype == kern.dtype
    assert bool(jnp.all(out == kern))

    # Larger conv weight (64x64x3x3, ~147 KiB f32) exercises the exact same
    # single-DMA path — no tiling branch needed.
    kern2 = init_conv_kernel_param(jax.random.PRNGKey(0), 64, 64, 3, 3)
    out2 = jax.block_until_ready(conv_kernel_forward(kern2))
    assert out2.shape == kern2.shape and out2.dtype == kern2.dtype
    assert bool(jnp.all(out2 == kern2))

    print("KERNEL_OK")
</pallas_src>

<mosaic_0001>
module attributes {stable_mosaic.version = 11 : i64} {
  func.func @_dma_identity_kernel(%arg0: memref<4x4x3x3xf32, #tpu.memory_space<any>>, %arg1: memref<4x4x3x3xf32, #tpu.memory_space<any>>, %arg2: memref<!tpu.dma_semaphore, #tpu.memory_space<semaphore_mem>>) attributes {dimension_semantics = [], scalar_prefetch = 0 : i64, scratch_operands = 1 : i64, tpu.core_type = #tpu.core_type<tc>} {
    tpu.enqueue_dma source(%arg0 : memref<4x4x3x3xf32, #tpu.memory_space<any>>) target(%arg1 : memref<4x4x3x3xf32, #tpu.memory_space<any>>) target_semaphore(%arg2 : memref<!tpu.dma_semaphore, #tpu.memory_space<semaphore_mem>>)
    tpu.wait_dma2 semaphore(%arg2 : memref<!tpu.dma_semaphore, #tpu.memory_space<semaphore_mem>>) src(%arg0 : memref<4x4x3x3xf32, #tpu.memory_space<any>>) dst(%arg1 : memref<4x4x3x3xf32, #tpu.memory_space<any>>)
    return
  }
}

</mosaic_0001>

<llo_original>
// kernel: tpu_custom_call.1
$region0: #{tpu_custom_call.1}
  #allocation0 [shape = 'u32[]', space=smem, size = 0x4, offset = 0x4, fixed_abs, tag = 'smem constant byte address 0x4 - core index']
  #allocation1 [shape = 'u32[72,128]{1,0:T(1,128)}', space=vmem, size = 0x9000, scoped, tag = 'internal scratch']
  #allocation2 [shape = 's32[1]{0}', space=sflag, size = 0x4, scoped, tag = 'scratch operand']
  #allocation3 [shape = 's32[]', space=sflag, size = 0x4, offset = 0, fixed_abs, tag = 'sflag constant byte address 0x0 - dummy sync flag']
  %s0 = inlined_call_operand.vmem [shape: f32[4,4,3,3], index: 0, kind: input, shape index: {}]
  %s1 = inlined_call_operand.vmem [shape: f32[4,4,3,3], index: 1, kind: output, shape index: {}]
  %s2 = sld [smem:[#allocation0]]
  $region39: #{tpu_custom_call.1} parent=0
    _
  %s4 = ssub.s32 1, %s2
  %s5 = scalar_select 0, %s4, %s2
  // Predicated region
  $region2: #{tpu_custom_call.1} parent=0 // pred_check
    _
  $region3: #{tpu_custom_call.1} parent=0 // pred_check_branch
    %7 = sbr.rel target = $region5
  $region4: #{tpu_custom_call.1} parent=0 // pred_region
    // Predicated region
    $region17: #{tpu_custom_call.1} parent=4 // pred_check
      _
    $region18: #{tpu_custom_call.1} parent=4 // pred_check_branch
      %53 = sbr.rel (0) target = $region20
    $region19: #{tpu_custom_call.1} parent=4 // pred_region
      loop: start=0, step=1, limit=1
      $region21: #{tpu_custom_call.1} parent=19 // loop_pre_header
        _
      $region22: #{tpu_custom_call.1} parent=19 // loop_header
        %s55 = sphi 0, %s59
        %p56 = scmp.ge.s32.totalorder %s55, 1
        %s60 = sphi %s0, %s0
        %s61 = sphi %s1, %s1
      $region23: #{tpu_custom_call.1} parent=19 // loop_header_branch
        %58 = sbr.rel (%p56) target = $region27
      $region24: #{tpu_custom_call.1} parent=19 // loop_body
        _
      $region25: #{tpu_custom_call.1} parent=19 // loop_footer
        %s59 = sadd.s32 1, %s55
      $region26: #{tpu_custom_call.1} parent=19 // loop_footer_branch
        %54 = sbr.rel target = $region22
      $region27: #{tpu_custom_call.1} parent=19 // loop_exit
        _
      %s63 = ssub.s32 8, 1
      loop: start=0, step=1, limit=1
      $region28: #{tpu_custom_call.1} parent=19 // loop_pre_header
        _
      $region29: #{tpu_custom_call.1} parent=19 // loop_header
        %s65 = sphi 0, %s69
        %p66 = scmp.ge.s32.totalorder %s65, 1
        %s70 = sphi %s0, %s0
        %s71 = sphi %s1, %s1
      $region30: #{tpu_custom_call.1} parent=19 // loop_header_branch
        %68 = sbr.rel (%p66) target = $region34
      $region31: #{tpu_custom_call.1} parent=19 // loop_body
        %v72 = vld [vmem:[%s70] sm:%s63]
        %73 = vst [vmem:[%s71] sm:%s63] %v72
        %v74 = vld [vmem:[%s70 + $0x4] sm:%s63]
        %75 = vst [vmem:[%s71 + $0x4] sm:%s63] %v74
        %v76 = vld [vmem:[%s70 + $0x8] sm:%s63]
        %77 = vst [vmem:[%s71 + $0x8] sm:%s63] %v76
        %v78 = vld [vmem:[%s70 + $0xc] sm:%s63]
        %79 = vst [vmem:[%s71 + $0xc] sm:%s63] %v78
        %v80 = vld [vmem:[%s70 + $0x10] sm:%s63]
        %81 = vst [vmem:[%s71 + $0x10] sm:%s63] %v80
        %v82 = vld [vmem:[%s70 + $0x14] sm:%s63]
        %83 = vst [vmem:[%s71 + $0x14] sm:%s63] %v82
        %v84 = vld [vmem:[%s70 + $0x18] sm:%s63]
        %85 = vst [vmem:[%s71 + $0x18] sm:%s63] %v84
        %v86 = vld [vmem:[%s70 + $0x1c] sm:%s63]
        %87 = vst [vmem:[%s71 + $0x1c] sm:%s63] %v86
        %v88 = vld [vmem:[%s70 + $0x20] sm:%s63]
        %89 = vst [vmem:[%s71 + $0x20] sm:%s63] %v88
        %v90 = vld [vmem:[%s70 + $0x24] sm:%s63]
        %91 = vst [vmem:[%s71 + $0x24] sm:%s63] %v90
        %v92 = vld [vmem:[%s70 + $0x28] sm:%s63]
        %93 = vst [vmem:[%s71 + $0x28] sm:%s63] %v92
        %v94 = vld [vmem:[%s70 + $0x2c] sm:%s63]
        %95 = vst [vmem:[%s71 + $0x2c] sm:%s63] %v94
        %v96 = vld [vmem:[%s70 + $0x30] sm:%s63]
        %97 = vst [vmem:[%s71 + $0x30] sm:%s63] %v96
        %v98 = vld [vmem:[%s70 + $0x34] sm:%s63]
        %99 = vst [vmem:[%s71 + $0x34] sm:%s63] %v98
        %v100 = vld [vmem:[%s70 + $0x38] sm:%s63]
        %101 = vst [vmem:[%s71 + $0x38] sm:%s63] %v100
        %v102 = vld [vmem:[%s70 + $0x3c] sm:%s63]
        %103 = vst [vmem:[%s71 + $0x3c] sm:%s63] %v102
      $region32: #{tpu_custom_call.1} parent=19 // loop_footer
        %s69 = sadd.s32 1, %s65
      $region33: #{tpu_custom_call.1} parent=19 // loop_footer_branch
        %64 = sbr.rel target = $region29
      $region34: #{tpu_custom_call.1} parent=19 // loop_exit
        _
    $region20: #{tpu_custom_call.1} parent=4 // pred_fallthru
      _
  $region5: #{tpu_custom_call.1} parent=0 // pred_fallthru
    _
  // Predicated region
  $region6: #{tpu_custom_call.1} parent=0 // pred_check
    _
  $region7: #{tpu_custom_call.1} parent=0 // pred_check_branch
    %9 = sbr.rel (0) target = $region9
  $region8: #{tpu_custom_call.1} parent=0 // pred_region
    %s11 = ssub.s32 8, 1
    loop: start=0, step=1, limit=1
    $region10: #{tpu_custom_call.1} parent=8 // loop_pre_header
      _
    $region11: #{tpu_custom_call.1} parent=8 // loop_header
      %s13 = sphi 0, %s17
      %p14 = scmp.ge.s32.totalorder %s13, 1
      %s18 = sphi %s0, %s0
      %s19 = sphi %s1, %s1
    $region12: #{tpu_custom_call.1} parent=8 // loop_header_branch
      %16 = sbr.rel (%p14) target = $region16
    $region13: #{tpu_custom_call.1} parent=8 // loop_body
      %v20 = vld [vmem:[%s18] sm:%s11]
      %21 = vst [vmem:[%s19] sm:%s11] %v20
      %v22 = vld [vmem:[%s18 + $0x4] sm:%s11]
      %23 = vst [vmem:[%s19 + $0x4] sm:%s11] %v22
      %v24 = vld [vmem:[%s18 + $0x8] sm:%s11]
      %25 = vst [vmem:[%s19 + $0x8] sm:%s11] %v24
      %v26 = vld [vmem:[%s18 + $0xc] sm:%s11]
      %27 = vst [vmem:[%s19 + $0xc] sm:%s11] %v26
      %v28 = vld [vmem:[%s18 + $0x10] sm:%s11]
      %29 = vst [vmem:[%s19 + $0x10] sm:%s11] %v28
      %v30 = vld [vmem:[%s18 + $0x14] sm:%s11]
      %31 = vst [vmem:[%s19 + $0x14] sm:%s11] %v30
      %v32 = vld [vmem:[%s18 + $0x18] sm:%s11]
      %33 = vst [vmem:[%s19 + $0x18] sm:%s11] %v32
      %v34 = vld [vmem:[%s18 + $0x1c] sm:%s11]
      %35 = vst [vmem:[%s19 + $0x1c] sm:%s11] %v34
      %v36 = vld [vmem:[%s18 + $0x20] sm:%s11]
      %37 = vst [vmem:[%s19 + $0x20] sm:%s11] %v36
      %v38 = vld [vmem:[%s18 + $0x24] sm:%s11]
      %39 = vst [vmem:[%s19 + $0x24] sm:%s11] %v38
      %v40 = vld [vmem:[%s18 + $0x28] sm:%s11]
      %41 = vst [vmem:[%s19 + $0x28] sm:%s11] %v40
      %v42 = vld [vmem:[%s18 + $0x2c] sm:%s11]
      %43 = vst [vmem:[%s19 + $0x2c] sm:%s11] %v42
      %v44 = vld [vmem:[%s18 + $0x30] sm:%s11]
      %45 = vst [vmem:[%s19 + $0x30] sm:%s11] %v44
      %v46 = vld [vmem:[%s18 + $0x34] sm:%s11]
      %47 = vst [vmem:[%s19 + $0x34] sm:%s11] %v46
      %v48 = vld [vmem:[%s18 + $0x38] sm:%s11]
      %49 = vst [vmem:[%s19 + $0x38] sm:%s11] %v48
      %v50 = vld [vmem:[%s18 + $0x3c] sm:%s11]
      %51 = vst [vmem:[%s19 + $0x3c] sm:%s11] %v50
    $region14: #{tpu_custom_call.1} parent=8 // loop_footer
      %s17 = sadd.s32 1, %s13
    $region15: #{tpu_custom_call.1} parent=8 // loop_footer_branch
      %12 = sbr.rel target = $region11
    $region16: #{tpu_custom_call.1} parent=8 // loop_exit
      _
  $region9: #{tpu_custom_call.1} parent=0 // pred_fallthru
    _
  // Predicated region
  $region35: #{tpu_custom_call.1} parent=0 // pred_check
    _
  $region36: #{tpu_custom_call.1} parent=0 // pred_check_branch
    %106 = sbr.rel (0) target = $region38
  $region37: #{tpu_custom_call.1} parent=0 // pred_region
    %107 = vsyncadd [#allocation2], 768
  $region38: #{tpu_custom_call.1} parent=0 // pred_fallthru
    _
  %s108 = smul.u32 4, 4
  %s109 = smul.u32 %s108, 3
  %s110 = smul.u32 %s109, 1
  %s111 = sshll.u32 %s110, 4
  %112 = dma.done [#allocation2], %s111
  %113 = vsyncmov [#allocation2]
  %s114 = vpop.sfrf %113
  %p115 = scmp.eq.s32.totalorder %s114, 0
  %p116 = pneg %p115
  %118 = shalt.err (%p116)

</llo_original>
